<compile_context>
chip_gen: v5e
topology: v5e:2x2
jax: 0.10.0
libtpu: 0.0.40
codegen_flags: <defaults>
</compile_context>

<pallas_src>
import functools

import numpy as np

import jax
import jax.numpy as jnp
from jax.experimental import pallas as pl
from jax.experimental.pallas import tpu as pltpu


# --------------------------------------------------------------------------- #
# Pass A: 3x3 'same' conv (one fused MXU matmul) + bias + ReLU + BN partials
# --------------------------------------------------------------------------- #
def _conv_relu_stats_kernel(x_ref, w_ref, m_ref, b_ref, act_ref, stats_ref, *,
                            img_w, n_lanes, compute_dtype):
    """B_blk images side-by-side on lanes, channels on sublanes.

    x_ref    : (Cin,  Lb)     Lb = B_blk * H * W (images contiguous on lanes)
    w_ref    : (Cout, 9*Cin)  conv weights, tap-major / channel-minor (compute dtype)
    m_ref    : (9,    Lb)     0/1 edge-validity mask per tap (compute dtype)
    b_ref    : (Cout, 1)      conv bias (f32)
    act_ref  : (Cout, Lb)     conv+bias+ReLU activations (lane-dense store)
    stats_ref: (Cout, 128)    lane 0 = sum, lane 1 = sum of squares (f32)
    """
    xc = x_ref[...].astype(compute_dtype)            # (Cin, Lb)
    masks = m_ref[...]                                # (9, Lb) in compute dtype

    # Patch slab (9*Cin, Lb): tap (dy, dx) contributes x[:, l + dy*W + dx] when
    # the shifted pixel is in-bounds (same image), else 0.  Static lane rotates
    # (XLU) + 0/1 mask multiply; rotations that cross image / array boundaries
    # are exactly the masked-out positions.
    taps = []
    t = 0
    for dy in (-1, 0, 1):
        for dx in (-1, 0, 1):
            d = dy * img_w + dx
            if d == 0:
                taps.append(xc)                                       # center tap
            else:
                shifted = pltpu.roll(xc, (-d) % n_lanes, axis=1)
                taps.append(shifted * masks[t:t + 1, :])
            t += 1
    slab = jnp.concatenate(taps, axis=0)              # (9*Cin, Lb), compute dtype

    # Single fused MXU matmul, f32 accumulation.
    acc = jnp.dot(w_ref[...], slab, preferred_element_type=jnp.float32)  # (Cout, Lb)
    acc = jnp.maximum(acc + b_ref[...], 0.0)          # bias + ReLU (f32)

    act_ref[...] = acc.astype(act_ref.dtype)          # lane-dense store

    # BN partials from the f32 accumulator, packed into a lane-dense (Cout, 128)
    # tile (lane 0: sum, lane 1: sum of squares) -> unmasked full-width store.
    s = jnp.sum(acc, axis=1, keepdims=True)           # (Cout, 1)
    ss = jnp.sum(acc * acc, axis=1, keepdims=True)    # (Cout, 1)
    lane = jax.lax.broadcasted_iota(jnp.int32, stats_ref.shape, 1)
    stats_ref[...] = jnp.where(lane == 0, s, 0.0) + jnp.where(lane == 1, ss, 0.0)


# --------------------------------------------------------------------------- #
# Pass B: apply precomputed BN scale/shift (pure streaming FMA)
# --------------------------------------------------------------------------- #
def _bn_apply_kernel(act_ref, ss_ref, out_ref):
    """act_ref/out_ref: (Cout, Lb); ss_ref: (Cout, 2) = [scale, shift]."""
    scale = ss_ref[:, 0:1]
    shift = ss_ref[:, 1:2]
    y = act_ref[...].astype(jnp.float32) * scale + shift
    out_ref[...] = y.astype(out_ref.dtype)


# --------------------------------------------------------------------------- #
# Helpers
# --------------------------------------------------------------------------- #
def _tap_edge_masks_np(H, W):
    """(9, H*W) masks: 1 where the (dy, dx)-shifted source pixel is in-bounds."""
    hh, ww = np.meshgrid(np.arange(H), np.arange(W), indexing="ij")
    rows = []
    for dy in (-1, 0, 1):
        for dx in (-1, 0, 1):
            valid = ((hh + dy >= 0) & (hh + dy < H) &
                     (ww + dx >= 0) & (ww + dx < W))
            rows.append(valid.reshape(-1).astype(np.float32))
    return np.stack(rows, axis=0)


def _pick_batch_block(N, Cin, Cout, L, in_bytes, cmp_bytes, act_bytes,
                      budget=12 * 1024 * 1024):
    """Largest divisor of N whose per-step working set fits the VMEM budget."""
    best = 1
    for b in range(1, N + 1):
        if N % b:
            continue
        per_step = (2 * Cin * b * L * in_bytes          # input block (double buffered)
                    + 9 * Cin * b * L * cmp_bytes       # patch slab
                    + Cout * b * L * 4                  # f32 accumulator
                    + 2 * Cout * b * L * act_bytes)     # activation block (double buffered)
        if per_step <= budget:
            best = b
    return best


# --------------------------------------------------------------------------- #
# Wrapper: NCHW in / NCHW out, matching the PyTorch module.
# --------------------------------------------------------------------------- #
@functools.partial(jax.jit,
                   static_argnames=("eps", "use_batchnorm", "compute_dtype"))
def conv_block_forward(x_nchw, w_oihw, bias, gamma, beta, *,
                       eps=1e-5, use_batchnorm=True,
                       compute_dtype=jnp.bfloat16):
    N, Cin, H, W = x_nchw.shape
    Cout = w_oihw.shape[0]
    L = H * W
    out_dtype = x_nchw.dtype
    act_dtype = compute_dtype if use_batchnorm else out_dtype

    B_blk = _pick_batch_block(
        N, Cin, Cout, L,
        in_bytes=jnp.dtype(x_nchw.dtype).itemsize,
        cmp_bytes=jnp.dtype(compute_dtype).itemsize,
        act_bytes=jnp.dtype(act_dtype).itemsize)
    n_blocks = N // B_blk
    Lb = B_blk * L

    # Batch side-by-side on lanes: x2[c, n*L + l] = x[n, c, l].
    x2 = jnp.transpose(x_nchw.reshape(N, Cin, L), (1, 0, 2)).reshape(Cin, N * L)
    # Weights tap-major / channel-minor, in the MXU compute dtype.
    w2 = jnp.transpose(w_oihw, (0, 2, 3, 1)).reshape(Cout, 9 * Cin)
    w2 = w2.astype(compute_dtype)
    bias2 = bias.reshape(Cout, 1).astype(jnp.float32)
    masks = jnp.asarray(np.tile(_tap_edge_masks_np(H, W), (1, B_blk)),
                        dtype=compute_dtype)                         # (9, Lb)

    cparams = pltpu.CompilerParams(
        dimension_semantics=("parallel",),
        vmem_limit_bytes=32 * 1024 * 1024)   # raises v5e's 16 MiB scoped default

    # ---- Pass A: conv + bias + ReLU + per-block BN partials ---------------- #
    act2, stats = pl.pallas_call(
        functools.partial(_conv_relu_stats_kernel, img_w=W, n_lanes=Lb,
                          compute_dtype=compute_dtype),
        out_shape=(
            jax.ShapeDtypeStruct((Cout, N * L), act_dtype),          # activations
            jax.ShapeDtypeStruct((n_blocks, Cout, 128), jnp.float32),  # BN partials
        ),
        grid=(n_blocks,),
        in_specs=[
            pl.BlockSpec((Cin, Lb), lambda i: (0, i)),
            pl.BlockSpec((Cout, 9 * Cin), lambda i: (0, 0)),
            pl.BlockSpec((9, Lb), lambda i: (0, 0)),
            pl.BlockSpec((Cout, 1), lambda i: (0, 0)),
        ],
        out_specs=(
            pl.BlockSpec((Cout, Lb), lambda i: (0, i)),
            pl.BlockSpec((None, Cout, 128), lambda i: (i, 0, 0)),
        ),
        compiler_params=cparams,
    )(x2, w2, masks, bias2)

    if not use_batchnorm:   # nn.Identity branch of the module
        return jnp.transpose(act2.reshape(Cout, N, H, W), (1, 0, 2, 3))

    # Tiny XLA step: combine partials, fold gamma/beta into per-channel FMA.
    totals = jnp.sum(stats, axis=0)                    # (Cout, 128)
    count = float(N * L)
    mean = totals[:, 0] / count                        # (Cout,)
    var = totals[:, 1] / count - mean * mean           # biased variance
    inv = jax.lax.rsqrt(var + eps)
    scale = gamma.astype(jnp.float32) * inv
    shift = beta.astype(jnp.float32) - mean * scale
    ss = jnp.stack([scale, shift], axis=1)             # (Cout, 2)

    # ---- Pass B: y = act * scale + shift, in place when dtypes allow ------- #
    io_alias = {0: 0} if jnp.dtype(act_dtype) == jnp.dtype(out_dtype) else {}
    out2 = pl.pallas_call(
        _bn_apply_kernel,
        out_shape=jax.ShapeDtypeStruct((Cout, N * L), out_dtype),
        grid=(n_blocks,),
        in_specs=[
            pl.BlockSpec((Cout, Lb), lambda i: (0, i)),
            pl.BlockSpec((Cout, 2), lambda i: (0, 0)),
        ],
        out_specs=pl.BlockSpec((Cout, Lb), lambda i: (0, i)),
        input_output_aliases=io_alias,
        compiler_params=cparams,
    )(act2, ss)

    # Back to NCHW (single XLA transpose over the output).
    return jnp.transpose(out2.reshape(Cout, N, H, W), (1, 0, 2, 3))


# --------------------------------------------------------------------------- #
# Pure-JAX reference (conv + relu + train-mode batchnorm) for validation.
# --------------------------------------------------------------------------- #
def _reference_forward(x_nchw, w_oihw, bias, gamma, beta):
    y = jax.lax.conv_general_dilated(
        x_nchw, w_oihw, window_strides=(1, 1), padding="SAME",
        dimension_numbers=("NCHW", "OIHW", "NCHW"),
    ) + bias[None, :, None, None]
    y = jnp.maximum(y, 0.0)
    mean = jnp.mean(y, axis=(0, 2, 3), keepdims=True)
    var = jnp.mean((y - mean) ** 2, axis=(0, 2, 3), keepdims=True)
    y = (y - mean) * jax.lax.rsqrt(var + 1e-5)
    return y * gamma[None, :, None, None] + beta[None, :, None, None]


if __name__ == "__main__":
    # Small shapes consistent with the module: batch=2, in_channels=4,
    # out_channels=8, 16x16 spatial.
    N, Cin, Cout, H, W = 2, 4, 8, 16, 16

    key = jax.random.PRNGKey(0)
    k_x, k_w, k_b = jax.random.split(key, 3)

    x = jax.random.normal(k_x, (N, Cin, H, W), dtype=jnp.float32)
    fan_in = Cin * 3 * 3
    w = jax.random.uniform(k_w, (Cout, Cin, 3, 3), jnp.float32,
                           minval=-1.0, maxval=1.0) / np.sqrt(fan_in)
    b = jax.random.uniform(k_b, (Cout,), jnp.float32,
                           minval=-1.0, maxval=1.0) / np.sqrt(fan_in)
    gamma = jnp.ones((Cout,), jnp.float32)   # BatchNorm2d default weight
    beta = jnp.zeros((Cout,), jnp.float32)   # BatchNorm2d default bias

    ref = _reference_forward(x, w, b, gamma, beta)

    # Exact-semantics validation path (f32 compute/intermediate): tight tolerance.
    out_f32 = jax.block_until_ready(
        conv_block_forward(x, w, b, gamma, beta, compute_dtype=jnp.float32))
    assert out_f32.shape == (N, Cout, H, W)
    assert jnp.allclose(out_f32, ref, atol=1e-4, rtol=1e-4), \
        float(jnp.max(jnp.abs(out_f32 - ref)))

    # Default performance path (bf16 MXU operands + bf16 intermediate):
    # looser tolerance against the f32 reference.
    out_bf16 = jax.block_until_ready(conv_block_forward(x, w, b, gamma, beta))
    assert out_bf16.shape == (N, Cout, H, W)
    assert jnp.allclose(out_bf16, ref, atol=1e-1, rtol=1e-1), \
        float(jnp.max(jnp.abs(out_bf16 - ref)))

    print("KERNEL_OK")
</pallas_src>

<mosaic_0001>
module attributes {stable_mosaic.version = 11 : i64} {
  func.func @_conv_relu_stats_kernel(%arg0: i32, %arg1: memref<4x512xf32, #tpu.memory_space<vmem>>, %arg2: memref<8x36xf32, #tpu.memory_space<vmem>>, %arg3: memref<9x512xf32, #tpu.memory_space<vmem>>, %arg4: memref<8x1xf32, #tpu.memory_space<vmem>>, %arg5: memref<8x512xf32, #tpu.memory_space<vmem>>, %arg6: memref<1x8x128xf32, #tpu.memory_space<vmem>>) attributes {dimension_semantics = [#tpu.dimension_semantics<parallel>], iteration_bounds = array<i64: 1>, scalar_prefetch = 0 : i64, scratch_operands = 0 : i64, tpu.core_type = #tpu.core_type<tc>, window_params = [{transform_indices = @transform_0, window_bounds = array<i64: 4, 512>}, {pipeline_mode = #tpu.pipeline_mode<synchronous>, transform_indices = @transform_1, window_bounds = array<i64: 8, 36>}, {pipeline_mode = #tpu.pipeline_mode<synchronous>, transform_indices = @transform_2, window_bounds = array<i64: 9, 512>}, {pipeline_mode = #tpu.pipeline_mode<synchronous>, transform_indices = @transform_3, window_bounds = array<i64: 8, 1>}, {transform_indices = @transform_4, window_bounds = array<i64: 8, 512>}, {transform_indices = @transform_5, window_bounds = array<i64: 1, 8, 128>}]} {
    %c0 = arith.constant 0 : index
    %c0_0 = arith.constant 0 : index
    %0 = vector.load %arg1[%c0, %c0_0] : memref<4x512xf32, #tpu.memory_space<vmem>>, vector<4x512xf32>
    %c0_1 = arith.constant 0 : index
    %c0_2 = arith.constant 0 : index
    %1 = vector.load %arg3[%c0_1, %c0_2] : memref<9x512xf32, #tpu.memory_space<vmem>>, vector<9x512xf32>
    %c17_i32 = arith.constant 17 : i32
    %2 = tpu.dynamic_rotate %0 by %c17_i32 dim 1 : vector<4x512xf32>, i32 -> vector<4x512xf32>
    %3 = vector.extract_strided_slice %1 {offsets = [0, 0], sizes = [1, 512], strides = [1, 1]} : vector<9x512xf32> to vector<1x512xf32>
    %4 = vector.broadcast %3 : vector<1x512xf32> to vector<4x512xf32>
    %5 = arith.mulf %2, %4 : vector<4x512xf32>
    %c16_i32 = arith.constant 16 : i32
    %6 = tpu.dynamic_rotate %0 by %c16_i32 dim 1 : vector<4x512xf32>, i32 -> vector<4x512xf32>
    %7 = vector.extract_strided_slice %1 {offsets = [1, 0], sizes = [1, 512], strides = [1, 1]} : vector<9x512xf32> to vector<1x512xf32>
    %8 = vector.broadcast %7 : vector<1x512xf32> to vector<4x512xf32>
    %9 = arith.mulf %6, %8 : vector<4x512xf32>
    %c15_i32 = arith.constant 15 : i32
    %10 = tpu.dynamic_rotate %0 by %c15_i32 dim 1 : vector<4x512xf32>, i32 -> vector<4x512xf32>
    %11 = vector.extract_strided_slice %1 {offsets = [2, 0], sizes = [1, 512], strides = [1, 1]} : vector<9x512xf32> to vector<1x512xf32>
    %12 = vector.broadcast %11 : vector<1x512xf32> to vector<4x512xf32>
    %13 = arith.mulf %10, %12 : vector<4x512xf32>
    %c1_i32 = arith.constant 1 : i32
    %14 = tpu.dynamic_rotate %0 by %c1_i32 dim 1 : vector<4x512xf32>, i32 -> vector<4x512xf32>
    %15 = vector.extract_strided_slice %1 {offsets = [3, 0], sizes = [1, 512], strides = [1, 1]} : vector<9x512xf32> to vector<1x512xf32>
    %16 = vector.broadcast %15 : vector<1x512xf32> to vector<4x512xf32>
    %17 = arith.mulf %14, %16 : vector<4x512xf32>
    %c511_i32 = arith.constant 511 : i32
    %18 = tpu.dynamic_rotate %0 by %c511_i32 dim 1 : vector<4x512xf32>, i32 -> vector<4x512xf32>
    %19 = vector.extract_strided_slice %1 {offsets = [5, 0], sizes = [1, 512], strides = [1, 1]} : vector<9x512xf32> to vector<1x512xf32>
    %20 = vector.broadcast %19 : vector<1x512xf32> to vector<4x512xf32>
    %21 = arith.mulf %18, %20 : vector<4x512xf32>
    %c497_i32 = arith.constant 497 : i32
    %22 = tpu.dynamic_rotate %0 by %c497_i32 dim 1 : vector<4x512xf32>, i32 -> vector<4x512xf32>
    %23 = vector.extract_strided_slice %1 {offsets = [6, 0], sizes = [1, 512], strides = [1, 1]} : vector<9x512xf32> to vector<1x512xf32>
    %24 = vector.broadcast %23 : vector<1x512xf32> to vector<4x512xf32>
    %25 = arith.mulf %22, %24 : vector<4x512xf32>
    %c496_i32 = arith.constant 496 : i32
    %26 = tpu.dynamic_rotate %0 by %c496_i32 dim 1 : vector<4x512xf32>, i32 -> vector<4x512xf32>
    %27 = vector.extract_strided_slice %1 {offsets = [7, 0], sizes = [1, 512], strides = [1, 1]} : vector<9x512xf32> to vector<1x512xf32>
    %28 = vector.broadcast %27 : vector<1x512xf32> to vector<4x512xf32>
    %29 = arith.mulf %26, %28 : vector<4x512xf32>
    %c495_i32 = arith.constant 495 : i32
    %30 = tpu.dynamic_rotate %0 by %c495_i32 dim 1 : vector<4x512xf32>, i32 -> vector<4x512xf32>
    %31 = vector.extract_strided_slice %1 {offsets = [8, 0], sizes = [1, 512], strides = [1, 1]} : vector<9x512xf32> to vector<1x512xf32>
    %32 = vector.broadcast %31 : vector<1x512xf32> to vector<4x512xf32>
    %33 = arith.mulf %30, %32 : vector<4x512xf32>
    %34 = tpu.concatenate %5, %9, %13, %17, %0, %21, %25, %29, %33 in 0 : vector<4x512xf32>, vector<4x512xf32>, vector<4x512xf32>, vector<4x512xf32>, vector<4x512xf32>, vector<4x512xf32>, vector<4x512xf32>, vector<4x512xf32>, vector<4x512xf32> -> vector<36x512xf32>
    %c0_3 = arith.constant 0 : index
    %c0_4 = arith.constant 0 : index
    %35 = vector.load %arg2[%c0_3, %c0_4] : memref<8x36xf32, #tpu.memory_space<vmem>>, vector<8x36xf32>
    %cst = arith.constant dense<0.000000e+00> : vector<8x512xf32>
    %36 = tpu.matmul %35, %34, %cst {dimension_numbers = #tpu.dot_dimension_numbers<[1], [0], [0], [1], [0, 0, 1, 1], [], []>} : vector<8x36xf32>, vector<36x512xf32>, vector<8x512xf32> -> vector<8x512xf32>
    %c0_5 = arith.constant 0 : index
    %c0_6 = arith.constant 0 : index
    %37 = vector.load %arg4[%c0_5, %c0_6] : memref<8x1xf32, #tpu.memory_space<vmem>>, vector<8x1xf32>
    %38 = vector.broadcast %37 : vector<8x1xf32> to vector<8x512xf32>
    %39 = arith.addf %36, %38 : vector<8x512xf32>
    %cst_7 = arith.constant 0.000000e+00 : f32
    %40 = vector.broadcast %cst_7 : f32 to vector<8x512xf32>
    %41 = arith.maximumf %39, %40 : vector<8x512xf32>
    %c0_8 = arith.constant 0 : index
    %c0_9 = arith.constant 0 : index
    %42 = vector.load %arg5[%c0_8, %c0_9] : memref<8x512xf32, #tpu.memory_space<vmem>>, vector<8x512xf32>
    tpu.vector_store %arg5[%c0_8, %c0_9], %41 {strides = array<i32>} : memref<8x512xf32, #tpu.memory_space<vmem>>, vector<8x512xf32>,
    %cst_10 = arith.constant dense<0.000000e+00> : vector<8xf32>
    %43 = vector.multi_reduction <add>, %41, %cst_10 [1] : vector<8x512xf32> to vector<8xf32>
    %44 = vector.shape_cast %43 : vector<8xf32> to vector<8x1xf32>
    %45 = arith.mulf %41, %41 : vector<8x512xf32>
    %cst_11 = arith.constant dense<0.000000e+00> : vector<8xf32>
    %46 = vector.multi_reduction <add>, %45, %cst_11 [1] : vector<8x512xf32> to vector<8xf32>
    %47 = vector.shape_cast %46 : vector<8xf32> to vector<8x1xf32>
    %48 = tpu.iota {dimensions = array<i32: 1>} : vector<8x128xi32>
    %c0_i32 = arith.constant 0 : i32
    %49 = vector.broadcast %c0_i32 : i32 to vector<8x128xi32>
    %50 = arith.cmpi eq, %48, %49 : vector<8x128xi32>
    %cst_12 = arith.constant 0.000000e+00 : f32
    %51 = vector.shape_cast %44 : vector<8x1xf32> to vector<8x1xf32>
    %52 = vector.broadcast %51 : vector<8x1xf32> to vector<8x128xf32>
    %53 = vector.broadcast %cst_12 : f32 to vector<8x128xf32>
    %54 = arith.select %50, %52, %53 : vector<8x128xi1>, vector<8x128xf32>
    %c1_i32_13 = arith.constant 1 : i32
    %55 = vector.broadcast %c1_i32_13 : i32 to vector<8x128xi32>
    %56 = arith.cmpi eq, %48, %55 : vector<8x128xi32>
    %cst_14 = arith.constant 0.000000e+00 : f32
    %57 = vector.shape_cast %47 : vector<8x1xf32> to vector<8x1xf32>
    %58 = vector.broadcast %57 : vector<8x1xf32> to vector<8x128xf32>
    %59 = vector.broadcast %cst_14 : f32 to vector<8x128xf32>
    %60 = arith.select %56, %58, %59 : vector<8x128xi1>, vector<8x128xf32>
    %61 = arith.addf %54, %60 : vector<8x128xf32>
    %c0_15 = arith.constant 0 : index
    %c0_16 = arith.constant 0 : index
    %c0_17 = arith.constant 0 : index
    %62 = vector.load %arg6[%c0_15, %c0_16, %c0_17] : memref<1x8x128xf32, #tpu.memory_space<vmem>>, vector<1x8x128xf32>
    %63 = vector.shape_cast %62 : vector<1x8x128xf32> to vector<8x128xf32>
    %64 = vector.shape_cast %61 : vector<8x128xf32> to vector<1x8x128xf32>
    tpu.vector_store %arg6[%c0_15, %c0_16, %c0_17], %64 {strides = array<i32>} : memref<1x8x128xf32, #tpu.memory_space<vmem>>, vector<1x8x128xf32>,
    return
  }
  func.func @transform_0(%arg0: i32) -> (i32, i32) {
    %c0_i32 = arith.constant 0 : i32
    %c0_i32_0 = arith.constant 0 : i32
    return %c0_i32, %arg0 : i32, i32
  }
  func.func @transform_1(%arg0: i32) -> (i32, i32) {
    %c0_i32 = arith.constant 0 : i32
    %c0_i32_0 = arith.constant 0 : i32
    %c0_i32_1 = arith.constant 0 : i32
    return %c0_i32, %c0_i32_0 : i32, i32
  }
  func.func @transform_2(%arg0: i32) -> (i32, i32) {
    %c0_i32 = arith.constant 0 : i32
    %c0_i32_0 = arith.constant 0 : i32
    %c0_i32_1 = arith.constant 0 : i32
    return %c0_i32, %c0_i32_0 : i32, i32
  }
  func.func @transform_3(%arg0: i32) -> (i32, i32) {
    %c0_i32 = arith.constant 0 : i32
    %c0_i32_0 = arith.constant 0 : i32
    %c0_i32_1 = arith.constant 0 : i32
    return %c0_i32, %c0_i32_0 : i32, i32
  }
  func.func @transform_4(%arg0: i32) -> (i32, i32) {
    %c0_i32 = arith.constant 0 : i32
    %c0_i32_0 = arith.constant 0 : i32
    return %c0_i32, %arg0 : i32, i32
  }
  func.func @transform_5(%arg0: i32) -> (i32, i32, i32) {
    %c0_i32 = arith.constant 0 : i32
    %c0_i32_0 = arith.constant 0 : i32
    %c0_i32_1 = arith.constant 0 : i32
    return %arg0, %c0_i32, %c0_i32_0 : i32, i32, i32
  }
}

module attributes {stable_mosaic.version = 11 : i64} {
  func.func @_bn_apply_kernel(%arg0: i32, %arg1: memref<8x512xf32, #tpu.memory_space<vmem>>, %arg2: memref<8x2xf32, #tpu.memory_space<vmem>>, %arg3: memref<8x512xf32, #tpu.memory_space<vmem>>) attributes {dimension_semantics = [#tpu.dimension_semantics<parallel>], iteration_bounds = array<i64: 1>, scalar_prefetch = 0 : i64, scratch_operands = 0 : i64, tpu.core_type = #tpu.core_type<tc>, window_params = [{transform_indices = @transform_0, window_bounds = array<i64: 8, 512>}, {pipeline_mode = #tpu.pipeline_mode<synchronous>, transform_indices = @transform_1, window_bounds = array<i64: 8, 2>}, {transform_indices = @transform_2, window_bounds = array<i64: 8, 512>}]} {
    %c0 = arith.constant 0 : index
    %c0_0 = arith.constant 0 : index
    %0 = vector.load %arg2[%c0, %c0_0] : memref<8x2xf32, #tpu.memory_space<vmem>>, vector<8x1xf32>
    %c0_1 = arith.constant 0 : index
    %c1 = arith.constant 1 : index
    %1 = vector.load %arg2[%c0_1, %c1] : memref<8x2xf32, #tpu.memory_space<vmem>>, vector<8x1xf32>
    %c0_2 = arith.constant 0 : index
    %c0_3 = arith.constant 0 : index
    %2 = vector.load %arg1[%c0_2, %c0_3] : memref<8x512xf32, #tpu.memory_space<vmem>>, vector<8x512xf32>
    %3 = vector.broadcast %0 : vector<8x1xf32> to vector<8x512xf32>
    %4 = arith.mulf %2, %3 : vector<8x512xf32>
    %5 = vector.broadcast %1 : vector<8x1xf32> to vector<8x512xf32>
    %6 = arith.addf %4, %5 : vector<8x512xf32>
    %c0_4 = arith.constant 0 : index
    %c0_5 = arith.constant 0 : index
    %7 = vector.load %arg3[%c0_4, %c0_5] : memref<8x512xf32, #tpu.memory_space<vmem>>, vector<8x512xf32>
    tpu.vector_store %arg3[%c0_4, %c0_5], %6 {strides = array<i32>} : memref<8x512xf32, #tpu.memory_space<vmem>>, vector<8x512xf32>,
    return
  }
  func.func @transform_0(%arg0: i32) -> (i32, i32) {
    %c0_i32 = arith.constant 0 : i32
    %c0_i32_0 = arith.constant 0 : i32
    return %c0_i32, %arg0 : i32, i32
  }
  func.func @transform_1(%arg0: i32) -> (i32, i32) {
    %c0_i32 = arith.constant 0 : i32
    %c0_i32_0 = arith.constant 0 : i32
    %c0_i32_1 = arith.constant 0 : i32
    return %c0_i32, %c0_i32_0 : i32, i32
  }
  func.func @transform_2(%arg0: i32) -> (i32, i32) {
    %c0_i32 = arith.constant 0 : i32
    %c0_i32_0 = arith.constant 0 : i32
    return %c0_i32, %arg0 : i32, i32
  }
}

</mosaic_0001>

<llo_original>
// kernel: conv_block_forward.3
$region0: #{conv_block_forward.3}
  #allocation0 [shape = 'u32[]', space=smem, size = 0x4, offset = 0x4, fixed_abs, tag = 'smem constant byte address 0x4 - core index']
  #allocation1 [shape = 'u32[72,128]{1,0:T(1,128)}', space=vmem, size = 0x9000, scoped, tag = 'internal scratch']
  %s0 = inlined_call_operand.vmem [shape: f32[8,512], index: 0, kind: input, shape index: {}, may-alias: {0,2}]
  %s1 = inlined_call_operand.vmem [shape: f32[8,2], index: 1, kind: input, shape index: {}]
  %s2 = inlined_call_operand.vmem [shape: f32[8,512], index: 2, kind: output, shape index: {}, may-alias: {0,2}]
  %s3 = sld [smem:[#allocation0]]
  $region18: #{conv_block_forward.3} parent=0
    _
  %s5 = ssub.s32 1, %s3
  %s6 = scalar_select 0, %s5, %s3
  // Predicated region
  $region2: #{conv_block_forward.3} parent=0 // pred_check
    _
  $region3: #{conv_block_forward.3} parent=0 // pred_check_branch
    %8 = sbr.rel (0) target = $region5
  $region4: #{conv_block_forward.3} parent=0 // pred_region
    _
  $region5: #{conv_block_forward.3} parent=0 // pred_fallthru
    _
  // Predicated region
  $region6: #{conv_block_forward.3} parent=0 // pred_check
    _
  $region7: #{conv_block_forward.3} parent=0 // pred_check_branch
    %10 = sbr.rel (0) target = $region9
  $region8: #{conv_block_forward.3} parent=0 // pred_region
    _
  $region9: #{conv_block_forward.3} parent=0 // pred_fallthru
    _
  %v11 = vld [vmem:[%s1] sm:$0xff]
  %v12 = vld [vmem:[%s0] sm:$0xff]
  %v13 = vld [vmem:[%s0 + $0x8] sm:$0xff]
  %v14 = vld [vmem:[%s0 + $0x10] sm:$0xff]
  %v15 = vld [vmem:[%s0 + $0x18] sm:$0xff]
  %17 = vset.pattern.permute.xlu0 0
  %18 = vperm.xlu0 %17, %v11
  %v19 = vpop.permute.xlu0 %18
  %v21 = vmul.f32 %v12, %v19
  %v22 = vmul.f32 %v13, %v19
  %v23 = vmul.f32 %v14, %v19
  %v24 = vmul.f32 %v15, %v19
  %25 = vset.pattern.permute.xlu0 1
  %26 = vperm.xlu0 %25, %v11
  %v27 = vpop.permute.xlu0 %26
  %v29 = vadd.f32 %v21, %v27
  %v30 = vadd.f32 %v22, %v27
  %v31 = vadd.f32 %v23, %v27
  %v32 = vadd.f32 %v24, %v27
  %33 = vst [vmem:[%s2] sm:$0xff] %v29
  %34 = vst [vmem:[%s2 + $0x8] sm:$0xff] %v30
  %35 = vst [vmem:[%s2 + $0x10] sm:$0xff] %v31
  %36 = vst [vmem:[%s2 + $0x18] sm:$0xff] %v32
  // Predicated region
  $region10: #{conv_block_forward.3} parent=0 // pred_check
    _
  $region11: #{conv_block_forward.3} parent=0 // pred_check_branch
    %38 = sbr.rel (0) target = $region13
  $region12: #{conv_block_forward.3} parent=0 // pred_region
    _
  $region13: #{conv_block_forward.3} parent=0 // pred_fallthru
    _
  // Predicated region
  $region14: #{conv_block_forward.3} parent=0 // pred_check
    _
  $region15: #{conv_block_forward.3} parent=0 // pred_check_branch
    %40 = sbr.rel (0) target = $region17
  $region16: #{conv_block_forward.3} parent=0 // pred_region
    _
  $region17: #{conv_block_forward.3} parent=0 // pred_fallthru
    _

// kernel: conv_block_forward.2
$region0: #{conv_block_forward.2}
  #allocation0 [shape = 'u32[]', space=smem, size = 0x4, offset = 0x4, fixed_abs, tag = 'smem constant byte address 0x4 - core index']
  #allocation1 [shape = 'u32[72,128]{1,0:T(1,128)}', space=vmem, size = 0x9000, scoped, tag = 'internal scratch']
  %s0 = inlined_call_operand.vmem [shape: f32[4,512], index: 0, kind: input, shape index: {}]
  %s1 = inlined_call_operand.vmem [shape: f32[8,36], index: 1, kind: input, shape index: {}]
  %s2 = inlined_call_operand.vmem [shape: f32[9,512], index: 2, kind: input, shape index: {}]
  %s3 = inlined_call_operand.vmem [shape: f32[8,1], index: 3, kind: input, shape index: {}]
  %s4 = inlined_call_operand.vmem [shape: f32[8,512], index: 4, kind: output, shape index: {0}]
  %s5 = inlined_call_operand.vmem [shape: f32[1,8,128], index: 5, kind: output, shape index: {1}]
  %6 = xla_tuple %s4, %s5
  %s7 = sld [smem:[#allocation0]]
  $region34: #{conv_block_forward.2} parent=0
    _
  %s9 = ssub.s32 1, %s7
  %s10 = scalar_select 0, %s9, %s7
  // Predicated region
  $region2: #{conv_block_forward.2} parent=0 // pred_check
    _
  $region3: #{conv_block_forward.2} parent=0 // pred_check_branch
    %12 = sbr.rel (0) target = $region5
  $region4: #{conv_block_forward.2} parent=0 // pred_region
    _
  $region5: #{conv_block_forward.2} parent=0 // pred_fallthru
    _
  // Predicated region
  $region6: #{conv_block_forward.2} parent=0 // pred_check
    _
  $region7: #{conv_block_forward.2} parent=0 // pred_check_branch
    %14 = sbr.rel (0) target = $region9
  $region8: #{conv_block_forward.2} parent=0 // pred_region
    _
  $region9: #{conv_block_forward.2} parent=0 // pred_fallthru
    _
  // Predicated region
  $region10: #{conv_block_forward.2} parent=0 // pred_check
    _
  $region11: #{conv_block_forward.2} parent=0 // pred_check_branch
    %16 = sbr.rel (0) target = $region13
  $region12: #{conv_block_forward.2} parent=0 // pred_region
    _
  $region13: #{conv_block_forward.2} parent=0 // pred_fallthru
    _
  // Predicated region
  $region14: #{conv_block_forward.2} parent=0 // pred_check
    _
  $region15: #{conv_block_forward.2} parent=0 // pred_check_branch
    %18 = sbr.rel (0) target = $region17
  $region16: #{conv_block_forward.2} parent=0 // pred_region
    _
  $region17: #{conv_block_forward.2} parent=0 // pred_fallthru
    _
  %v19 = vld [vmem:[%s0] sm:$0xff]
  %v20 = vld [vmem:[%s0 + $0x8] sm:$0xff]
  %v21 = vld [vmem:[%s2] sm:$0xff]
  %v22 = vld [vmem:[%s2 + $0x8] sm:$0xff]
  %v23 = vld [vmem:[%s2 + $0x10] sm:$0xff]
  %v24 = vld [vmem:[%s2 + $0x18] sm:$0xff]
  %v25 = vld [vmem:[%s2 + $0x20] sm:$0x1]
  %v26 = vld [vmem:[%s2 + $0x28] sm:$0x1]
  %v27 = vld [vmem:[%s2 + $0x30] sm:$0x1]
  %v28 = vld [vmem:[%s2 + $0x38] sm:$0x1]
  %31 = vst [vmem:[#allocation1] ss:$2 sm:$0xff] %v19
  %s32 = scalar_lea.vmem [#allocation1], 16
  %33 = vst [vmem:[%s32] ss:$2 sm:$0xff] %v20
  %v34 = vld.sshfl [vmem:[#allocation1] sm:$0xff pattern:$0x75316420]
  %v35 = vld.sshfl [vmem:[#allocation1 + $0x8] sm:$0xff pattern:$0x75316420]
  %v36 = vld.sshfl [vmem:[#allocation1 + $0x10] sm:$0xff pattern:$0x75316420]
  %v37 = vld.sshfl [vmem:[#allocation1 + $0x18] sm:$0xff pattern:$0x75316420]
  %42 = vrot.lane.b32.xlu0 %v34, 17
  %v43 = vpop.permute.xlu0 %42
  %44 = vrot.lane.b32.xlu0 %v35, 17
  %v45 = vpop.permute.xlu0 %44
  %46 = vrot.lane.b32.xlu0 %v36, 17
  %v47 = vpop.permute.xlu0 %46
  %48 = vrot.lane.b32.xlu0 %v37, 17
  %v49 = vpop.permute.xlu0 %48
  %v50 = vlaneseq
  %v51 = vand.u32 %v50, 127
  %vm52 = vcmp.lt.s32.totalorder %v51, 17
  %v53 = vsel %vm52, %v47, %v49
  %v54 = vsel %vm52, %v45, %v47
  %v55 = vsel %vm52, %v43, %v45
  %v56 = vsel %vm52, %v49, %v43
  %v57 = vperm.slane %v21, 0
  %v58 = vperm.slane %v22, 0
  %v59 = vperm.slane %v23, 0
  %v60 = vperm.slane %v24, 0
  %v61 = vmul.f32 %v56, %v57
  %v62 = vmul.f32 %v55, %v58
  %v63 = vmul.f32 %v54, %v59
  %v64 = vmul.f32 %v53, %v60
  %65 = vst [vmem:[#allocation1] ss:$2 sm:$0xff] %v19
  %s66 = scalar_lea.vmem [#allocation1], 16
  %67 = vst [vmem:[%s66] ss:$2 sm:$0xff] %v20
  %v68 = vld.sshfl [vmem:[#allocation1] sm:$0xff pattern:$0x75316420]
  %v69 = vld.sshfl [vmem:[#allocation1 + $0x8] sm:$0xff pattern:$0x75316420]
  %v70 = vld.sshfl [vmem:[#allocation1 + $0x10] sm:$0xff pattern:$0x75316420]
  %v71 = vld.sshfl [vmem:[#allocation1 + $0x18] sm:$0xff pattern:$0x75316420]
  %76 = vrot.lane.b32.xlu0 %v68, 16
  %v77 = vpop.permute.xlu0 %76
  %78 = vrot.lane.b32.xlu0 %v69, 16
  %v79 = vpop.permute.xlu0 %78
  %80 = vrot.lane.b32.xlu0 %v70, 16
  %v81 = vpop.permute.xlu0 %80
  %82 = vrot.lane.b32.xlu0 %v71, 16
  %v83 = vpop.permute.xlu0 %82
  %vm84 = vcmp.lt.s32.totalorder %v51, 16
  %v85 = vsel %vm84, %v81, %v83
  %v86 = vsel %vm84, %v79, %v81
  %v87 = vsel %vm84, %v77, %v79
  %v88 = vsel %vm84, %v83, %v77
  %v89 = vperm.slane %v21, 1
  %v90 = vperm.slane %v22, 1
  %v91 = vperm.slane %v23, 1
  %v92 = vperm.slane %v24, 1
  %v93 = vmul.f32 %v88, %v89
  %v94 = vmul.f32 %v87, %v90
  %v95 = vmul.f32 %v86, %v91
  %v96 = vmul.f32 %v85, %v92
  %97 = vst [vmem:[#allocation1] ss:$2 sm:$0xff] %v19
  %s98 = scalar_lea.vmem [#allocation1], 16
  %99 = vst [vmem:[%s98] ss:$2 sm:$0xff] %v20
  %v100 = vld.sshfl [vmem:[#allocation1] sm:$0xff pattern:$0x75316420]
  %v101 = vld.sshfl [vmem:[#allocation1 + $0x8] sm:$0xff pattern:$0x75316420]
  %v102 = vld.sshfl [vmem:[#allocation1 + $0x10] sm:$0xff pattern:$0x75316420]
  %v103 = vld.sshfl [vmem:[#allocation1 + $0x18] sm:$0xff pattern:$0x75316420]
  %108 = vrot.lane.b32.xlu0 %v100, 15
  %v109 = vpop.permute.xlu0 %108
  %110 = vrot.lane.b32.xlu0 %v101, 15
  %v111 = vpop.permute.xlu0 %110
  %112 = vrot.lane.b32.xlu0 %v102, 15
  %v113 = vpop.permute.xlu0 %112
  %114 = vrot.lane.b32.xlu0 %v103, 15
  %v115 = vpop.permute.xlu0 %114
  %vm116 = vcmp.lt.s32.totalorder %v51, 15
  %v117 = vsel %vm116, %v113, %v115
  %v118 = vsel %vm116, %v111, %v113
  %v119 = vsel %vm116, %v109, %v111
  %v120 = vsel %vm116, %v115, %v109
  %v121 = vperm.slane %v21, 2
  %v122 = vperm.slane %v22, 2
  %v123 = vperm.slane %v23, 2
  %v124 = vperm.slane %v24, 2
  %v125 = vmul.f32 %v120, %v121
  %v126 = vmul.f32 %v119, %v122
  %v127 = vmul.f32 %v118, %v123
  %v128 = vmul.f32 %v117, %v124
  %129 = vst [vmem:[#allocation1] ss:$2 sm:$0xff] %v19
  %s130 = scalar_lea.vmem [#allocation1], 16
  %131 = vst [vmem:[%s130] ss:$2 sm:$0xff] %v20
  %v132 = vld.sshfl [vmem:[#allocation1] sm:$0xff pattern:$0x75316420]
  %v133 = vld.sshfl [vmem:[#allocation1 + $0x8] sm:$0xff pattern:$0x75316420]
  %v134 = vld.sshfl [vmem:[#allocation1 + $0x10] sm:$0xff pattern:$0x75316420]
  %v135 = vld.sshfl [vmem:[#allocation1 + $0x18] sm:$0xff pattern:$0x75316420]
  %140 = vrot.lane.b32.xlu0 %v132, 1
  %v141 = vpop.permute.xlu0 %140
  %142 = vrot.lane.b32.xlu0 %v133, 1
  %v143 = vpop.permute.xlu0 %142
  %144 = vrot.lane.b32.xlu0 %v134, 1
  %v145 = vpop.permute.xlu0 %144
  %146 = vrot.lane.b32.xlu0 %v135, 1
  %v147 = vpop.permute.xlu0 %146
  %vm148 = vcmp.lt.s32.totalorder %v51, 1
  %v149 = vsel %vm148, %v145, %v147
  %v150 = vsel %vm148, %v143, %v145
  %v151 = vsel %vm148, %v141, %v143
  %v152 = vsel %vm148, %v147, %v141
  %v153 = vperm.slane %v21, 3
  %v154 = vperm.slane %v22, 3
  %v155 = vperm.slane %v23, 3
  %v156 = vperm.slane %v24, 3
  %v157 = vmul.f32 %v152, %v153
  %v158 = vmul.f32 %v151, %v154
  %v159 = vmul.f32 %v150, %v155
  %v160 = vmul.f32 %v149, %v156
  %161 = vst [vmem:[#allocation1] ss:$2 sm:$0xff] %v19
  %s162 = scalar_lea.vmem [#allocation1], 16
  %163 = vst [vmem:[%s162] ss:$2 sm:$0xff] %v20
  %v164 = vld.sshfl [vmem:[#allocation1] sm:$0xff pattern:$0x75316420]
  %v165 = vld.sshfl [vmem:[#allocation1 + $0x8] sm:$0xff pattern:$0x75316420]
  %v166 = vld.sshfl [vmem:[#allocation1 + $0x10] sm:$0xff pattern:$0x75316420]
  %v167 = vld.sshfl [vmem:[#allocation1 + $0x18] sm:$0xff pattern:$0x75316420]
  %172 = vrot.lane.b32.xlu0 %v164, 127
  %v173 = vpop.permute.xlu0 %172
  %174 = vrot.lane.b32.xlu0 %v165, 127
  %v175 = vpop.permute.xlu0 %174
  %176 = vrot.lane.b32.xlu0 %v166, 127
  %v177 = vpop.permute.xlu0 %176
  %178 = vrot.lane.b32.xlu0 %v167, 127
  %v179 = vpop.permute.xlu0 %178
  %vm180 = vcmp.lt.s32.totalorder %v51, 127
  %v181 = vsel %vm180, %v177, %v179
  %v182 = vsel %vm180, %v175, %v177
  %v183 = vsel %vm180, %v173, %v175
  %v184 = vsel %vm180, %v179, %v173
  %v185 = vperm.slane %v21, 5
  %v186 = vperm.slane %v22, 5
  %v187 = vperm.slane %v23, 5
  %v188 = vperm.slane %v24, 5
  %v189 = vmul.f32 %v183, %v185
  %v190 = vmul.f32 %v182, %v186
  %v191 = vmul.f32 %v181, %v187
  %v192 = vmul.f32 %v184, %v188
  %193 = vst [vmem:[#allocation1] ss:$2 sm:$0xff] %v19
  %s194 = scalar_lea.vmem [#allocation1], 16
  %195 = vst [vmem:[%s194] ss:$2 sm:$0xff] %v20
  %v196 = vld.sshfl [vmem:[#allocation1] sm:$0xff pattern:$0x75316420]
  %v197 = vld.sshfl [vmem:[#allocation1 + $0x8] sm:$0xff pattern:$0x75316420]
  %v198 = vld.sshfl [vmem:[#allocation1 + $0x10] sm:$0xff pattern:$0x75316420]
  %v199 = vld.sshfl [vmem:[#allocation1 + $0x18] sm:$0xff pattern:$0x75316420]
  %204 = vrot.lane.b32.xlu0 %v196, 113
  %v205 = vpop.permute.xlu0 %204
  %206 = vrot.lane.b32.xlu0 %v197, 113
  %v207 = vpop.permute.xlu0 %206
  %208 = vrot.lane.b32.xlu0 %v198, 113
  %v209 = vpop.permute.xlu0 %208
  %210 = vrot.lane.b32.xlu0 %v199, 113
  %v211 = vpop.permute.xlu0 %210
  %vm212 = vcmp.lt.s32.totalorder %v51, 113
  %v213 = vsel %vm212, %v209, %v211
  %v214 = vsel %vm212, %v207, %v209
  %v215 = vsel %vm212, %v205, %v207
  %v216 = vsel %vm212, %v211, %v205
  %v217 = vperm.slane %v21, 6
  %v218 = vperm.slane %v22, 6
  %v219 = vperm.slane %v23, 6
  %v220 = vperm.slane %v24, 6
  %v221 = vmul.f32 %v215, %v217
  %v222 = vmul.f32 %v214, %v218
  %v223 = vmul.f32 %v213, %v219
  %v224 = vmul.f32 %v216, %v220
  %225 = vst [vmem:[#allocation1] ss:$2 sm:$0xff] %v19
  %s226 = scalar_lea.vmem [#allocation1], 16
  %227 = vst [vmem:[%s226] ss:$2 sm:$0xff] %v20
  %v228 = vld.sshfl [vmem:[#allocation1] sm:$0xff pattern:$0x75316420]
  %v229 = vld.sshfl [vmem:[#allocation1 + $0x8] sm:$0xff pattern:$0x75316420]
  %v230 = vld.sshfl [vmem:[#allocation1 + $0x10] sm:$0xff pattern:$0x75316420]
  %v231 = vld.sshfl [vmem:[#allocation1 + $0x18] sm:$0xff pattern:$0x75316420]
  %236 = vrot.lane.b32.xlu0 %v228, 112
  %v237 = vpop.permute.xlu0 %236
  %238 = vrot.lane.b32.xlu0 %v229, 112
  %v239 = vpop.permute.xlu0 %238
  %240 = vrot.lane.b32.xlu0 %v230, 112
  %v241 = vpop.permute.xlu0 %240
  %242 = vrot.lane.b32.xlu0 %v231, 112
  %v243 = vpop.permute.xlu0 %242
  %vm244 = vcmp.lt.s32.totalorder %v51, 112
  %v245 = vsel %vm244, %v241, %v243
  %v246 = vsel %vm244, %v239, %v241
  %v247 = vsel %vm244, %v237, %v239
  %v248 = vsel %vm244, %v243, %v237
  %v249 = vperm.slane %v21, 7
  %v250 = vperm.slane %v22, 7
  %v251 = vperm.slane %v23, 7
  %v252 = vperm.slane %v24, 7
  %v253 = vmul.f32 %v247, %v249
  %v254 = vmul.f32 %v246, %v250
  %v255 = vmul.f32 %v245, %v251
  %v256 = vmul.f32 %v248, %v252
  %257 = vst [vmem:[#allocation1] ss:$2 sm:$0xff] %v19
  %s258 = scalar_lea.vmem [#allocation1], 16
  %259 = vst [vmem:[%s258] ss:$2 sm:$0xff] %v20
  %v260 = vld.sshfl [vmem:[#allocation1] sm:$0xff pattern:$0x75316420]
  %v261 = vld.sshfl [vmem:[#allocation1 + $0x8] sm:$0xff pattern:$0x75316420]
  %v262 = vld.sshfl [vmem:[#allocation1 + $0x10] sm:$0xff pattern:$0x75316420]
  %v263 = vld.sshfl [vmem:[#allocation1 + $0x18] sm:$0xff pattern:$0x75316420]
  %268 = vrot.lane.b32.xlu0 %v260, 111
  %v269 = vpop.permute.xlu0 %268
  %270 = vrot.lane.b32.xlu0 %v261, 111
  %v271 = vpop.permute.xlu0 %270
  %272 = vrot.lane.b32.xlu0 %v262, 111
  %v273 = vpop.permute.xlu0 %272
  %274 = vrot.lane.b32.xlu0 %v263, 111
  %v275 = vpop.permute.xlu0 %274
  %vm276 = vcmp.lt.s32.totalorder %v51, 111
  %v277 = vsel %vm276, %v273, %v275
  %v278 = vsel %vm276, %v271, %v273
  %v279 = vsel %vm276, %v269, %v271
  %v280 = vsel %vm276, %v275, %v269
  %v281 = vperm.slane %v25, 0
  %v282 = vperm.slane %v26, 0
  %v283 = vperm.slane %v27, 0
  %v284 = vperm.slane %v28, 0
  %v285 = vmul.f32 %v279, %v281
  %v286 = vmul.f32 %v278, %v282
  %v287 = vmul.f32 %v277, %v283
  %v288 = vmul.f32 %v280, %v284
  %v293 = vrot.slane %v93, 4
  %v294 = vrot.slane %v94, 4
  %v295 = vrot.slane %v95, 4
  %v296 = vrot.slane %v96, 4
  %v305 = vrot.slane %v157, 4
  %v306 = vrot.slane %v158, 4
  %v307 = vrot.slane %v159, 4
  %v308 = vrot.slane %v160, 4
  %313 = vst [vmem:[#allocation1] ss:$2 sm:$0xff] %v19
  %s314 = scalar_lea.vmem [#allocation1], 16
  %315 = vst [vmem:[%s314] ss:$2 sm:$0xff] %v20
  %v316 = vld.sshfl [vmem:[#allocation1] sm:$0xff pattern:$0x75316420]
  %v317 = vld.sshfl [vmem:[#allocation1 + $0x8] sm:$0xff pattern:$0x75316420]
  %v318 = vld.sshfl [vmem:[#allocation1 + $0x10] sm:$0xff pattern:$0x75316420]
  %v319 = vld.sshfl [vmem:[#allocation1 + $0x18] sm:$0xff pattern:$0x75316420]
  %v328 = vrot.slane %v189, 4
  %v329 = vrot.slane %v190, 4
  %v330 = vrot.slane %v191, 4
  %v331 = vrot.slane %v192, 4
  %v340 = vrot.slane %v253, 4
  %v341 = vrot.slane %v254, 4
  %v342 = vrot.slane %v255, 4
  %v343 = vrot.slane %v256, 4
  %vm348 = vcmask 1043456
  %v349 = vsel %vm348, %v61, %v293
  %v350 = vsel %vm348, %v62, %v294
  %v351 = vsel %vm348, %v63, %v295
  %v352 = vsel %vm348, %v64, %v296
  %v353 = vsel %vm348, %v125, %v305
  %v354 = vsel %vm348, %v126, %v306
  %v355 = vsel %vm348, %v127, %v307
  %v356 = vsel %vm348, %v128, %v308
  %v357 = vsel %vm348, %v316, %v328
  %v358 = vsel %vm348, %v317, %v329
  %v359 = vsel %vm348, %v318, %v330
  %v360 = vsel %vm348, %v319, %v331
  %v361 = vsel %vm348, %v221, %v340
  %v362 = vsel %vm348, %v222, %v341
  %v363 = vsel %vm348, %v223, %v342
  %v364 = vsel %vm348, %v224, %v343
  %v365 = vld [vmem:[%s1] sm:$0xff]
  %v366 = vld [vmem:[%s3] sm:$0xff]
  %368 = vset.pattern.permute.xlu0 0
  %369 = vperm.xlu0 %368, %v366
  %v370 = vpop.permute.xlu0 %369
  %vm372 = vcmask 293888
  %v374 = vsel %vm372, %v365, 0
  %v377 = vsel %vm348, %v285, 0
  %v380 = vsel %vm348, %v286, 0
  %v383 = vsel %vm348, %v287, 0
  %v386 = vsel %vm348, %v288, 0
  %388 = vmatpush.msra.mxu0 0.0
  %389 = vmatpush.msra.mxu0 0.0
  %390 = vmatpush.msra.mxu0 0.0
  %391 = vmatpush.msra.mxu0 0.0
  %392 = vmatpush.msra.mxu0 0.0
  %393 = vmatpush.msra.mxu0 0.0
  %394 = vmatpush.msra.mxu0 0.0
  %395 = vmatpush.msra.mxu0 0.0
  %396 = vmatpush.msra.mxu0 0.0
  %397 = vmatpush.msra.mxu0 0.0
  %398 = vmatpush.msra.mxu0 0.0
  %399 = vmatpush.msra.mxu0 %v377
  %400 = vmatpush.msra.mxu0 %v361
  %401 = vmatpush.msra.mxu0 %v357
  %402 = vmatpush.msra.mxu0 %v353
  %403 = vmatpush.msra.mxu0 %v349
  %404 = vmatmul.f32.gmra.mxu0 %v374
  %v405 = vpop.f32.mrf.mxu0
  %v406 = vadd.f32 %v370, %v405
  %407 = vdwg.mxu0
  %408 = vmatpush.msra.mxu0 0.0
  %409 = vmatpush.msra.mxu0 0.0
  %410 = vmatpush.msra.mxu0 0.0
  %411 = vmatpush.msra.mxu0 0.0
  %412 = vmatpush.msra.mxu0 0.0
  %413 = vmatpush.msra.mxu0 0.0
  %414 = vmatpush.msra.mxu0 0.0
  %415 = vmatpush.msra.mxu0 0.0
  %416 = vmatpush.msra.mxu0 0.0
  %417 = vmatpush.msra.mxu0 0.0
  %418 = vmatpush.msra.mxu0 0.0
  %419 = vmatpush.msra.mxu0 %v380
  %420 = vmatpush.msra.mxu0 %v362
  %421 = vmatpush.msra.mxu0 %v358
  %422 = vmatpush.msra.mxu0 %v354
  %423 = vmatpush.msra.mxu0 %v350
  %424 = vmatmul.f32.gmra.mxu0 %v374
  %v425 = vpop.f32.mrf.mxu0
  %v426 = vadd.f32 %v370, %v425
  %427 = vdwg.mxu0
  %428 = vmatpush.msra.mxu0 0.0
  %429 = vmatpush.msra.mxu0 0.0
  %430 = vmatpush.msra.mxu0 0.0
  %431 = vmatpush.msra.mxu0 0.0
  %432 = vmatpush.msra.mxu0 0.0
  %433 = vmatpush.msra.mxu0 0.0
  %434 = vmatpush.msra.mxu0 0.0
  %435 = vmatpush.msra.mxu0 0.0
  %436 = vmatpush.msra.mxu0 0.0
  %437 = vmatpush.msra.mxu0 0.0
  %438 = vmatpush.msra.mxu0 0.0
  %439 = vmatpush.msra.mxu0 %v383
  %440 = vmatpush.msra.mxu0 %v363
  %441 = vmatpush.msra.mxu0 %v359
  %442 = vmatpush.msra.mxu0 %v355
  %443 = vmatpush.msra.mxu0 %v351
  %444 = vmatmul.f32.gmra.mxu0 %v374
  %v445 = vpop.f32.mrf.mxu0
  %v446 = vadd.f32 %v370, %v445
  %447 = vdwg.mxu0
  %448 = vmatpush.msra.mxu0 0.0
  %449 = vmatpush.msra.mxu0 0.0
  %450 = vmatpush.msra.mxu0 0.0
  %451 = vmatpush.msra.mxu0 0.0
  %452 = vmatpush.msra.mxu0 0.0
  %453 = vmatpush.msra.mxu0 0.0
  %454 = vmatpush.msra.mxu0 0.0
  %455 = vmatpush.msra.mxu0 0.0
  %456 = vmatpush.msra.mxu0 0.0
  %457 = vmatpush.msra.mxu0 0.0
  %458 = vmatpush.msra.mxu0 0.0
  %459 = vmatpush.msra.mxu0 %v386
  %460 = vmatpush.msra.mxu0 %v364
  %461 = vmatpush.msra.mxu0 %v360
  %462 = vmatpush.msra.mxu0 %v356
  %463 = vmatpush.msra.mxu0 %v352
  %464 = vmatmul.f32.gmra.mxu0 %v374
  %v465 = vpop.f32.mrf.mxu0
  %v466 = vadd.f32 %v370, %v465
  %467 = vdwg.mxu0
  %v468 = vmax.f32 %v406, 0.0
  %v469 = vmax.f32 %v426, 0.0
  %v470 = vmax.f32 %v446, 0.0
  %v471 = vmax.f32 %v466, 0.0
  %472 = vst [vmem:[%s4] sm:$0xff] %v468
  %473 = vst [vmem:[%s4 + $0x8] sm:$0xff] %v469
  %474 = vst [vmem:[%s4 + $0x10] sm:$0xff] %v470
  %475 = vst [vmem:[%s4 + $0x18] sm:$0xff] %v471
  %v476 = vadd.f32 %v468, %v469
  %v477 = vadd.f32 %v476, %v470
  %v478 = vadd.f32 %v477, %v471
  %479 = vadd.xlane.f32.xlu0 %v478
  %v480 = vpop.xlane.xlu0 %479
  %v481 = vmul.f32 %v468, %v468
  %v482 = vmul.f32 %v469, %v469
  %v483 = vmul.f32 %v470, %v470
  %v484 = vmul.f32 %v471, %v471
  %v485 = vadd.f32 %v481, %v482
  %v486 = vadd.f32 %v485, %v483
  %v487 = vadd.f32 %v486, %v484
  %488 = vadd.xlane.f32.xlu0 %v487
  %v489 = vpop.xlane.xlu0 %488
  %vm490 = vcmp.eq.s32.totalorder %v51, 0
  %v491 = vsel %vm490, %v480, 0.0
  %vm492 = vcmp.eq.s32.totalorder %v51, 1
  %v493 = vsel %vm492, %v489, 0.0
  %v494 = vadd.f32 %v491, %v493
  %495 = vst [vmem:[%s5] sm:$0xff] %v494
  // Predicated region
  $region18: #{conv_block_forward.2} parent=0 // pred_check
    _
  $region19: #{conv_block_forward.2} parent=0 // pred_check_branch
    %497 = sbr.rel (0) target = $region21
  $region20: #{conv_block_forward.2} parent=0 // pred_region
    _
  $region21: #{conv_block_forward.2} parent=0 // pred_fallthru
    _
  // Predicated region
  $region22: #{conv_block_forward.2} parent=0 // pred_check
    _
  $region23: #{conv_block_forward.2} parent=0 // pred_check_branch
    %499 = sbr.rel (0) target = $region25
  $region24: #{conv_block_forward.2} parent=0 // pred_region
    _
  $region25: #{conv_block_forward.2} parent=0 // pred_fallthru
    _
  // Predicated region
  $region26: #{conv_block_forward.2} parent=0 // pred_check
    _
  $region27: #{conv_block_forward.2} parent=0 // pred_check_branch
    %501 = sbr.rel (0) target = $region29
  $region28: #{conv_block_forward.2} parent=0 // pred_region
    _
  $region29: #{conv_block_forward.2} parent=0 // pred_fallthru
    _
  // Predicated region
  $region30: #{conv_block_forward.2} parent=0 // pred_check
    _
  $region31: #{conv_block_forward.2} parent=0 // pred_check_branch
    %503 = sbr.rel (0) target = $region33
  $region32: #{conv_block_forward.2} parent=0 // pred_region
    _
  $region33: #{conv_block_forward.2} parent=0 // pred_fallthru
    _

</llo_original>
